<compile_context>
chip_gen: v7x
topology: tpu7x:2x2x1
jax: 0.10.0
libtpu: 0.0.40
codegen_flags: <defaults>
</compile_context>

<pallas_src>
import jax
import jax.numpy as jnp
from jax.experimental import pallas as pl
from jax.experimental.pallas import tpu as pltpu

IN_DIM = 28 * 28
H_DIM = 50
OUT_DIM = 10
MAX_TB = 1024  # batch-tile rows; ~1.6 MB bf16 x tile, double-buffered 3.2 MB


def mlp_kernel(x_ref, w1_ref, b1_ref, w2_ref, b2_ref, w3_ref, b3_ref,
               l1_ref, l2_ref, out_ref):
    # layer1 = relu(x @ W1 + b1)      -- bf16 dot operands, f32 accumulate
    x = x_ref[...]
    h1 = jnp.dot(x, w1_ref[...], preferred_element_type=jnp.float32) + b1_ref[...]
    h1 = jnp.maximum(h1, 0.0)
    l1_ref[...] = h1.astype(l1_ref.dtype)

    # layer2 = relu(layer1 @ W2 + b2)
    h2 = jnp.dot(h1.astype(w2_ref.dtype), w2_ref[...],
                 preferred_element_type=jnp.float32) + b2_ref[...]
    h2 = jnp.maximum(h2, 0.0)
    l2_ref[...] = h2.astype(l2_ref.dtype)

    # output = softmax(layer2 @ W3 + b3, dim=1)   -- epilogue fully in f32
    logits = jnp.dot(h2.astype(w3_ref.dtype), w3_ref[...],
                     preferred_element_type=jnp.float32) + b3_ref[...]
    m = jnp.max(logits, axis=1, keepdims=True)
    e = jnp.exp(logits - m)
    denom = jnp.sum(e, axis=1, keepdims=True)
    # exact reciprocal: keeps softmax within tight tolerance of the f32 reference
    out_ref[...] = (e * pl.reciprocal(denom, approx=False)).astype(out_ref.dtype)


def _round_up(n, m):
    return ((n + m - 1) // m) * m


def prepare_params(params, compute_dtype=jnp.bfloat16):
    """One-time glue (outside the per-call forward): transpose weights to
    [in, out] and cast dot operands to bf16; biases stay f32."""
    return {
        "w1t": params["w1"].T.astype(compute_dtype),   # [784, 50]
        "w2t": params["w2"].T.astype(compute_dtype),   # [50, 50]
        "w3t": params["w3"].T.astype(compute_dtype),   # [50, 10]
        "b1": params["b1"].reshape(1, -1).astype(jnp.float32),
        "b2": params["b2"].reshape(1, -1).astype(jnp.float32),
        "b3": params["b3"].reshape(1, -1).astype(jnp.float32),
    }


@jax.jit
def neural_net_forward(x, prepped):
    """x: [B, 784] float32.  Returns (layer1 [B,50], layer2 [B,50], output [B,10])."""
    B = x.shape[0]
    TB = min(MAX_TB, _round_up(max(B, 1), 8))   # sublane-aligned batch tile
    B_pad = _round_up(B, TB)
    n_blocks = B_pad // TB

    x_c = x.astype(prepped["w1t"].dtype)
    if B_pad != B:
        x_c = jnp.pad(x_c, ((0, B_pad - B), (0, 0)))

    # Weights/biases: full-array block, same block index every grid step -> VMEM-resident.
    def weight_spec(shape):
        return pl.BlockSpec(shape, lambda i: (0, 0))

    # Batch-tiled arrays: one TB-row slab per grid step.
    def batch_spec(cols):
        return pl.BlockSpec((TB, cols), lambda i: (i, 0))

    l1, l2, out = pl.pallas_call(
        mlp_kernel,
        out_shape=(
            jax.ShapeDtypeStruct((B_pad, H_DIM), jnp.float32),
            jax.ShapeDtypeStruct((B_pad, H_DIM), jnp.float32),
            jax.ShapeDtypeStruct((B_pad, OUT_DIM), jnp.float32),
        ),
        grid=(n_blocks,),
        in_specs=[
            batch_spec(IN_DIM),
            weight_spec((IN_DIM, H_DIM)), weight_spec((1, H_DIM)),
            weight_spec((H_DIM, H_DIM)), weight_spec((1, H_DIM)),
            weight_spec((H_DIM, OUT_DIM)), weight_spec((1, OUT_DIM)),
        ],
        out_specs=(
            batch_spec(H_DIM),
            batch_spec(H_DIM),
            batch_spec(OUT_DIM),
        ),
        compiler_params=pltpu.CompilerParams(
            dimension_semantics=("parallel",),   # shards batch axis across v7x's 2 TCs
            vmem_limit_bytes=32 << 20,           # headroom on v7x's 64 MiB physical VMEM
        ),
    )(x_c, prepped["w1t"], prepped["b1"], prepped["w2t"], prepped["b2"],
      prepped["w3t"], prepped["b3"])

    if B_pad != B:
        l1, l2, out = l1[:B], l2[:B], out[:B]
    return l1, l2, out


def init_params(key):
    """Deterministic init mimicking nn.Linear default (uniform(-1/sqrt(fan_in), +))."""
    ks = jax.random.split(key, 6)

    def linear(kw, kb, fan_in, fan_out):
        bound = 1.0 / jnp.sqrt(fan_in)
        w = jax.random.uniform(kw, (fan_out, fan_in), jnp.float32, -bound, bound)
        b = jax.random.uniform(kb, (fan_out,), jnp.float32, -bound, bound)
        return w, b

    w1, b1 = linear(ks[0], ks[1], IN_DIM, H_DIM)
    w2, b2 = linear(ks[2], ks[3], H_DIM, H_DIM)
    w3, b3 = linear(ks[4], ks[5], H_DIM, OUT_DIM)
    return {"w1": w1, "b1": b1, "w2": w2, "b2": b2, "w3": w3, "b3": b3}


if __name__ == "__main__":
    key = jax.random.PRNGKey(0)
    k_params, k_x = jax.random.split(key)
    params = init_params(k_params)
    prepped = prepare_params(params)   # transposes / bf16 casts done once, not per forward

    B = 8
    x = jax.random.normal(k_x, (B, IN_DIM), jnp.float32)

    layer1, layer2, output = neural_net_forward(x, prepped)
    jax.block_until_ready((layer1, layer2, output))

    # Pure-JAX f32 reference (PyTorch semantics).  bf16 dot inputs in the kernel
    # introduce ~1e-2-level differences, so tolerances are relaxed accordingly.
    h1_ref = jnp.maximum(x @ params["w1"].T + params["b1"], 0.0)
    h2_ref = jnp.maximum(h1_ref @ params["w2"].T + params["b2"], 0.0)
    out_ref = jax.nn.softmax(h2_ref @ params["w3"].T + params["b3"], axis=1)
    assert layer1.shape == (B, H_DIM) and layer2.shape == (B, H_DIM) and output.shape == (B, OUT_DIM)
    assert jnp.allclose(layer1, h1_ref, atol=5e-2, rtol=5e-2)
    assert jnp.allclose(layer2, h2_ref, atol=5e-2, rtol=5e-2)
    assert jnp.allclose(output, out_ref, atol=2e-2, rtol=2e-2)
    assert jnp.allclose(output.sum(axis=1), 1.0, atol=1e-5)   # valid softmax rows

    print("KERNEL_OK")
</pallas_src>

<mosaic_0001>
module attributes {stable_mosaic.version = 11 : i64} {
  func.func @mlp_kernel(%arg0: i32, %arg1: memref<8x784xbf16, #tpu.memory_space<vmem>>, %arg2: memref<784x50xbf16, #tpu.memory_space<vmem>>, %arg3: memref<1x50xf32, #tpu.memory_space<vmem>>, %arg4: memref<50x50xbf16, #tpu.memory_space<vmem>>, %arg5: memref<1x50xf32, #tpu.memory_space<vmem>>, %arg6: memref<50x10xbf16, #tpu.memory_space<vmem>>, %arg7: memref<1x10xf32, #tpu.memory_space<vmem>>, %arg8: memref<8x50xf32, #tpu.memory_space<vmem>>, %arg9: memref<8x50xf32, #tpu.memory_space<vmem>>, %arg10: memref<8x10xf32, #tpu.memory_space<vmem>>) attributes {dimension_semantics = [#tpu.dimension_semantics<parallel>], iteration_bounds = array<i64: 1>, scalar_prefetch = 0 : i64, scratch_operands = 0 : i64, tpu.core_type = #tpu.core_type<tc>, window_params = [{transform_indices = @transform_0, window_bounds = array<i64: 8, 784>}, {pipeline_mode = #tpu.pipeline_mode<synchronous>, transform_indices = @transform_1, window_bounds = array<i64: 784, 50>}, {pipeline_mode = #tpu.pipeline_mode<synchronous>, transform_indices = @transform_2, window_bounds = array<i64: 1, 50>}, {pipeline_mode = #tpu.pipeline_mode<synchronous>, transform_indices = @transform_3, window_bounds = array<i64: 50, 50>}, {pipeline_mode = #tpu.pipeline_mode<synchronous>, transform_indices = @transform_4, window_bounds = array<i64: 1, 50>}, {pipeline_mode = #tpu.pipeline_mode<synchronous>, transform_indices = @transform_5, window_bounds = array<i64: 50, 10>}, {pipeline_mode = #tpu.pipeline_mode<synchronous>, transform_indices = @transform_6, window_bounds = array<i64: 1, 10>}, {transform_indices = @transform_7, window_bounds = array<i64: 8, 50>}, {transform_indices = @transform_8, window_bounds = array<i64: 8, 50>}, {transform_indices = @transform_9, window_bounds = array<i64: 8, 10>}]} {
    %c0 = arith.constant 0 : index
    %c0_0 = arith.constant 0 : index
    %0 = vector.load %arg1[%c0, %c0_0] : memref<8x784xbf16, #tpu.memory_space<vmem>>, vector<8x784xbf16>
    %c0_1 = arith.constant 0 : index
    %c0_2 = arith.constant 0 : index
    %1 = vector.load %arg2[%c0_1, %c0_2] : memref<784x50xbf16, #tpu.memory_space<vmem>>, vector<784x50xbf16>
    %cst = arith.constant dense<0.000000e+00> : vector<8x50xf32>
    %2 = tpu.matmul %0, %1, %cst {dimension_numbers = #tpu.dot_dimension_numbers<[1], [0], [0], [1], [0, 0, 1, 1], [], []>} : vector<8x784xbf16>, vector<784x50xbf16>, vector<8x50xf32> -> vector<8x50xf32>
    %c0_3 = arith.constant 0 : index
    %c0_4 = arith.constant 0 : index
    %3 = vector.load %arg3[%c0_3, %c0_4] : memref<1x50xf32, #tpu.memory_space<vmem>>, vector<1x50xf32>
    %4 = vector.broadcast %3 : vector<1x50xf32> to vector<8x50xf32>
    %5 = arith.addf %2, %4 : vector<8x50xf32>
    %cst_5 = arith.constant 0.000000e+00 : f32
    %6 = vector.broadcast %cst_5 : f32 to vector<8x50xf32>
    %7 = arith.maximumf %5, %6 : vector<8x50xf32>
    %c0_6 = arith.constant 0 : index
    %c0_7 = arith.constant 0 : index
    %8 = vector.load %arg8[%c0_6, %c0_7] : memref<8x50xf32, #tpu.memory_space<vmem>>, vector<8x50xf32>
    tpu.vector_store %arg8[%c0_6, %c0_7], %7 {strides = array<i32>} : memref<8x50xf32, #tpu.memory_space<vmem>>, vector<8x50xf32>,
    %9 = arith.truncf %7 : vector<8x50xf32> to vector<8x50xbf16>
    %c0_8 = arith.constant 0 : index
    %c0_9 = arith.constant 0 : index
    %10 = vector.load %arg4[%c0_8, %c0_9] : memref<50x50xbf16, #tpu.memory_space<vmem>>, vector<50x50xbf16>
    %cst_10 = arith.constant dense<0.000000e+00> : vector<8x50xf32>
    %11 = tpu.matmul %9, %10, %cst_10 {dimension_numbers = #tpu.dot_dimension_numbers<[1], [0], [0], [1], [0, 0, 1, 1], [], []>} : vector<8x50xbf16>, vector<50x50xbf16>, vector<8x50xf32> -> vector<8x50xf32>
    %c0_11 = arith.constant 0 : index
    %c0_12 = arith.constant 0 : index
    %12 = vector.load %arg5[%c0_11, %c0_12] : memref<1x50xf32, #tpu.memory_space<vmem>>, vector<1x50xf32>
    %13 = vector.broadcast %12 : vector<1x50xf32> to vector<8x50xf32>
    %14 = arith.addf %11, %13 : vector<8x50xf32>
    %cst_13 = arith.constant 0.000000e+00 : f32
    %15 = vector.broadcast %cst_13 : f32 to vector<8x50xf32>
    %16 = arith.maximumf %14, %15 : vector<8x50xf32>
    %c0_14 = arith.constant 0 : index
    %c0_15 = arith.constant 0 : index
    %17 = vector.load %arg9[%c0_14, %c0_15] : memref<8x50xf32, #tpu.memory_space<vmem>>, vector<8x50xf32>
    tpu.vector_store %arg9[%c0_14, %c0_15], %16 {strides = array<i32>} : memref<8x50xf32, #tpu.memory_space<vmem>>, vector<8x50xf32>,
    %18 = arith.truncf %16 : vector<8x50xf32> to vector<8x50xbf16>
    %c0_16 = arith.constant 0 : index
    %c0_17 = arith.constant 0 : index
    %19 = vector.load %arg6[%c0_16, %c0_17] : memref<50x10xbf16, #tpu.memory_space<vmem>>, vector<50x10xbf16>
    %cst_18 = arith.constant dense<0.000000e+00> : vector<8x10xf32>
    %20 = tpu.matmul %18, %19, %cst_18 {dimension_numbers = #tpu.dot_dimension_numbers<[1], [0], [0], [1], [0, 0, 1, 1], [], []>} : vector<8x50xbf16>, vector<50x10xbf16>, vector<8x10xf32> -> vector<8x10xf32>
    %c0_19 = arith.constant 0 : index
    %c0_20 = arith.constant 0 : index
    %21 = vector.load %arg7[%c0_19, %c0_20] : memref<1x10xf32, #tpu.memory_space<vmem>>, vector<1x10xf32>
    %22 = vector.broadcast %21 : vector<1x10xf32> to vector<8x10xf32>
    %23 = arith.addf %20, %22 : vector<8x10xf32>
    %cst_21 = arith.constant dense<0xFF800000> : vector<8xf32>
    %24 = vector.multi_reduction <maximumf>, %23, %cst_21 [1] : vector<8x10xf32> to vector<8xf32>
    %25 = vector.shape_cast %24 : vector<8xf32> to vector<8x1xf32>
    %26 = vector.broadcast %25 : vector<8x1xf32> to vector<8x10xf32>
    %27 = arith.subf %23, %26 : vector<8x10xf32>
    %28 = math.exp %27 : vector<8x10xf32>
    %cst_22 = arith.constant dense<0.000000e+00> : vector<8xf32>
    %29 = vector.multi_reduction <add>, %28, %cst_22 [1] : vector<8x10xf32> to vector<8xf32>
    %30 = vector.shape_cast %29 : vector<8xf32> to vector<8x1xf32>
    %31 = tpu.reciprocal %30 : vector<8x1xf32> -> vector<8x1xf32>
    %32 = vector.broadcast %31 : vector<8x1xf32> to vector<8x10xf32>
    %33 = arith.mulf %28, %32 : vector<8x10xf32>
    %c0_23 = arith.constant 0 : index
    %c0_24 = arith.constant 0 : index
    %34 = vector.load %arg10[%c0_23, %c0_24] : memref<8x10xf32, #tpu.memory_space<vmem>>, vector<8x10xf32>
    tpu.vector_store %arg10[%c0_23, %c0_24], %33 {strides = array<i32>} : memref<8x10xf32, #tpu.memory_space<vmem>>, vector<8x10xf32>,
    return
  }
  func.func @transform_0(%arg0: i32) -> (i32, i32) {
    %c0_i32 = arith.constant 0 : i32
    %c0_i32_0 = arith.constant 0 : i32
    return %arg0, %c0_i32 : i32, i32
  }
  func.func @transform_1(%arg0: i32) -> (i32, i32) {
    %c0_i32 = arith.constant 0 : i32
    %c0_i32_0 = arith.constant 0 : i32
    %c0_i32_1 = arith.constant 0 : i32
    return %c0_i32, %c0_i32_0 : i32, i32
  }
  func.func @transform_2(%arg0: i32) -> (i32, i32) {
    %c0_i32 = arith.constant 0 : i32
    %c0_i32_0 = arith.constant 0 : i32
    %c0_i32_1 = arith.constant 0 : i32
    return %c0_i32, %c0_i32_0 : i32, i32
  }
  func.func @transform_3(%arg0: i32) -> (i32, i32) {
    %c0_i32 = arith.constant 0 : i32
    %c0_i32_0 = arith.constant 0 : i32
    %c0_i32_1 = arith.constant 0 : i32
    return %c0_i32, %c0_i32_0 : i32, i32
  }
  func.func @transform_4(%arg0: i32) -> (i32, i32) {
    %c0_i32 = arith.constant 0 : i32
    %c0_i32_0 = arith.constant 0 : i32
    %c0_i32_1 = arith.constant 0 : i32
    return %c0_i32, %c0_i32_0 : i32, i32
  }
  func.func @transform_5(%arg0: i32) -> (i32, i32) {
    %c0_i32 = arith.constant 0 : i32
    %c0_i32_0 = arith.constant 0 : i32
    %c0_i32_1 = arith.constant 0 : i32
    return %c0_i32, %c0_i32_0 : i32, i32
  }
  func.func @transform_6(%arg0: i32) -> (i32, i32) {
    %c0_i32 = arith.constant 0 : i32
    %c0_i32_0 = arith.constant 0 : i32
    %c0_i32_1 = arith.constant 0 : i32
    return %c0_i32, %c0_i32_0 : i32, i32
  }
  func.func @transform_7(%arg0: i32) -> (i32, i32) {
    %c0_i32 = arith.constant 0 : i32
    %c0_i32_0 = arith.constant 0 : i32
    return %arg0, %c0_i32 : i32, i32
  }
  func.func @transform_8(%arg0: i32) -> (i32, i32) {
    %c0_i32 = arith.constant 0 : i32
    %c0_i32_0 = arith.constant 0 : i32
    return %arg0, %c0_i32 : i32, i32
  }
  func.func @transform_9(%arg0: i32) -> (i32, i32) {
    %c0_i32 = arith.constant 0 : i32
    %c0_i32_0 = arith.constant 0 : i32
    return %arg0, %c0_i32 : i32, i32
  }
}

</mosaic_0001>

<llo_original>
// kernel: neural_net_forward.1
$region0: #{neural_net_forward.1}
  #allocation0 [shape = 'u32[]', space=smem, size = 0x4, offset = 0x4, fixed_abs, tag = 'smem constant byte address 0x4 - core index']
  #allocation1 [shape = 'u32[144,128]{1,0:T(1,128)}', space=vmem, size = 0x12000, scoped, tag = 'internal scratch']
  %s0 = inlined_call_operand.vmem [shape: bf16[8,784], index: 0, kind: input, shape index: {}]
  %s1 = inlined_call_operand.vmem [shape: bf16[784,50], index: 1, kind: input, shape index: {}]
  %s2 = inlined_call_operand.vmem [shape: f32[1,50], index: 2, kind: input, shape index: {}]
  %s3 = inlined_call_operand.vmem [shape: bf16[50,50], index: 3, kind: input, shape index: {}]
  %s4 = inlined_call_operand.vmem [shape: f32[1,50], index: 4, kind: input, shape index: {}]
  %s5 = inlined_call_operand.vmem [shape: bf16[50,10], index: 5, kind: input, shape index: {}]
  %s6 = inlined_call_operand.vmem [shape: f32[1,10], index: 6, kind: input, shape index: {}]
  %s7 = inlined_call_operand.hbm [shape: f32[8,50], index: 7, kind: output, shape index: {0}]
  %s8 = inlined_call_operand.hbm [shape: f32[8,50], index: 8, kind: output, shape index: {1}]
  %s9 = inlined_call_operand.hbm [shape: f32[8,10], index: 9, kind: output, shape index: {2}]
  %10 = xla_tuple %s7, %s8, %s9
  %s11 = sld [smem:[#allocation0]]
  $region54: #{neural_net_forward.1} parent=0
    _
  %s13 = ssub.s32 1, %s11
  %s14 = scalar_select 0, %s13, %s11
  $region1: #{neural_net_forward.1} parent=0
    #allocation2 [shape = 'u8[4096]{0}', space=vmem, size = 0x1000, scoped, tag = 'output window, operand 0, single buffered']
    #allocation3 [shape = 's32[1]{0}', space=sflag, size = 0x4, scoped, tag = 'scoped memory for neural_net_forward.1']
    #allocation4 [shape = 'u8[4096]{0}', space=vmem, size = 0x1000, scoped, tag = 'output window, operand 1, single buffered']
    #allocation5 [shape = 's32[1]{0}', space=sflag, size = 0x4, scoped, tag = 'scoped memory for neural_net_forward.1']
    #allocation6 [shape = 'u8[4096]{0}', space=vmem, size = 0x1000, scoped, tag = 'output window, operand 2, single buffered']
    %15 = vsyncpa [#allocation3], 0
    %16 = vsyncpa [#allocation5], 0
    // Predicated region
    $region2: #{neural_net_forward.1} parent=1 // pred_check
      _
    $region3: #{neural_net_forward.1} parent=1 // pred_check_branch
      %18 = sbr.rel (0) target = $region5
    $region4: #{neural_net_forward.1} parent=1 // pred_region
      _
    $region5: #{neural_net_forward.1} parent=1 // pred_fallthru
      _
    // Predicated region
    $region6: #{neural_net_forward.1} parent=1 // pred_check
      _
    $region7: #{neural_net_forward.1} parent=1 // pred_check_branch
      %20 = sbr.rel (0) target = $region9
    $region8: #{neural_net_forward.1} parent=1 // pred_region
      _
    $region9: #{neural_net_forward.1} parent=1 // pred_fallthru
      _
    // Predicated region
    $region10: #{neural_net_forward.1} parent=1 // pred_check
      _
    $region11: #{neural_net_forward.1} parent=1 // pred_check_branch
      %22 = sbr.rel (0) target = $region13
    $region12: #{neural_net_forward.1} parent=1 // pred_region
      _
    $region13: #{neural_net_forward.1} parent=1 // pred_fallthru
      _
    // Predicated region
    $region14: #{neural_net_forward.1} parent=1 // pred_check
      _
    $region15: #{neural_net_forward.1} parent=1 // pred_check_branch
      %24 = sbr.rel (0) target = $region17
    $region16: #{neural_net_forward.1} parent=1 // pred_region
      _
    $region17: #{neural_net_forward.1} parent=1 // pred_fallthru
      _
    // Predicated region
    $region18: #{neural_net_forward.1} parent=1 // pred_check
      _
    $region19: #{neural_net_forward.1} parent=1 // pred_check_branch
      %26 = sbr.rel (0) target = $region21
    $region20: #{neural_net_forward.1} parent=1 // pred_region
      _
    $region21: #{neural_net_forward.1} parent=1 // pred_fallthru
      _
    // Predicated region
    $region22: #{neural_net_forward.1} parent=1 // pred_check
      _
    $region23: #{neural_net_forward.1} parent=1 // pred_check_branch
      %28 = sbr.rel (0) target = $region25
    $region24: #{neural_net_forward.1} parent=1 // pred_region
      _
    $region25: #{neural_net_forward.1} parent=1 // pred_fallthru
      _
    // Predicated region
    $region26: #{neural_net_forward.1} parent=1 // pred_check
      _
    $region27: #{neural_net_forward.1} parent=1 // pred_check_branch
      %30 = sbr.rel (0) target = $region29
    $region28: #{neural_net_forward.1} parent=1 // pred_region
      _
    $region29: #{neural_net_forward.1} parent=1 // pred_fallthru
      _
    %v32 = vld [vmem:[%s0] sm:$0xff]
    %v33 = vld [vmem:[%s0 + $0x8] sm:$0xff]
    %v34 = vld [vmem:[%s0 + $0x10] sm:$0xff]
    %v35 = vld [vmem:[%s0 + $0x18] sm:$0xf]
    %v36 = vld [vmem:[%s1] sm:$0xf]
    %v37 = vld [vmem:[%s1 + $0x4] sm:$0xf]
    %v38 = vld [vmem:[%s1 + $0x8] sm:$0xf]
    %v39 = vld [vmem:[%s1 + $0xc] sm:$0xf]
    %v40 = vld [vmem:[%s1 + $0x10] sm:$0xf]
    %v41 = vld [vmem:[%s1 + $0x14] sm:$0xf]
    %v42 = vld [vmem:[%s1 + $0x18] sm:$0xf]
    %v43 = vld [vmem:[%s1 + $0x1c] sm:$0xf]
    %v44 = vld [vmem:[%s1 + $0x20] sm:$0xf]
    %v45 = vld [vmem:[%s1 + $0x24] sm:$0xf]
    %v46 = vld [vmem:[%s1 + $0x28] sm:$0xf]
    %v47 = vld [vmem:[%s1 + $0x2c] sm:$0xf]
    %v48 = vld [vmem:[%s1 + $0x30] sm:$0xf]
    %v49 = vld [vmem:[%s1 + $0x34] sm:$0xf]
    %v50 = vld [vmem:[%s1 + $0x38] sm:$0xf]
    %v51 = vld [vmem:[%s1 + $0x3c] sm:$0xf]
    %v52 = vld [vmem:[%s1 + $0x40] sm:$0xf]
    %v53 = vld [vmem:[%s1 + $0x44] sm:$0xf]
    %v54 = vld [vmem:[%s1 + $0x48] sm:$0xf]
    %v55 = vld [vmem:[%s1 + $0x4c] sm:$0xf]
    %v56 = vld [vmem:[%s1 + $0x50] sm:$0xf]
    %v57 = vld [vmem:[%s1 + $0x54] sm:$0xf]
    %v58 = vld [vmem:[%s1 + $0x58] sm:$0xf]
    %v59 = vld [vmem:[%s1 + $0x5c] sm:$0xf]
    %v60 = vld [vmem:[%s1 + $0x60] sm:$0xf]
    %v61 = vld [vmem:[%s1 + $0x64] sm:$0xf]
    %v62 = vld [vmem:[%s1 + $0x68] sm:$0xf]
    %v63 = vld [vmem:[%s1 + $0x6c] sm:$0xf]
    %v64 = vld [vmem:[%s1 + $0x70] sm:$0xf]
    %v65 = vld [vmem:[%s1 + $0x74] sm:$0xf]
    %v66 = vld [vmem:[%s1 + $0x78] sm:$0xf]
    %v67 = vld [vmem:[%s1 + $0x7c] sm:$0xf]
    %v68 = vld [vmem:[%s1 + $0x80] sm:$0xf]
    %v69 = vld [vmem:[%s1 + $0x84] sm:$0xf]
    %v70 = vld [vmem:[%s1 + $0x88] sm:$0xf]
    %v71 = vld [vmem:[%s1 + $0x8c] sm:$0xf]
    %v72 = vld [vmem:[%s1 + $0x90] sm:$0xf]
    %v73 = vld [vmem:[%s1 + $0x94] sm:$0xf]
    %v74 = vld [vmem:[%s1 + $0x98] sm:$0xf]
    %v75 = vld [vmem:[%s1 + $0x9c] sm:$0xf]
    %v76 = vld [vmem:[%s1 + $0xa0] sm:$0xf]
    %v77 = vld [vmem:[%s1 + $0xa4] sm:$0xf]
    %v78 = vld [vmem:[%s1 + $0xa8] sm:$0xf]
    %v79 = vld [vmem:[%s1 + $0xac] sm:$0xf]
    %v80 = vld [vmem:[%s1 + $0xb0] sm:$0xf]
    %v81 = vld [vmem:[%s1 + $0xb4] sm:$0xf]
    %v82 = vld [vmem:[%s1 + $0xb8] sm:$0xf]
    %v83 = vld [vmem:[%s1 + $0xbc] sm:$0xf]
    %v84 = vld [vmem:[%s1 + $0xc0] sm:$0xf]
    %v85 = vld [vmem:[%s1 + $0xc4] sm:$0xf]
    %v86 = vld [vmem:[%s1 + $0xc8] sm:$0xf]
    %v87 = vld [vmem:[%s1 + $0xcc] sm:$0xf]
    %v88 = vld [vmem:[%s1 + $0xd0] sm:$0xf]
    %v89 = vld [vmem:[%s1 + $0xd4] sm:$0xf]
    %v90 = vld [vmem:[%s1 + $0xd8] sm:$0xf]
    %v91 = vld [vmem:[%s1 + $0xdc] sm:$0xf]
    %v92 = vld [vmem:[%s1 + $0xe0] sm:$0xf]
    %v93 = vld [vmem:[%s1 + $0xe4] sm:$0xf]
    %v94 = vld [vmem:[%s1 + $0xe8] sm:$0xf]
    %v95 = vld [vmem:[%s1 + $0xec] sm:$0xf]
    %v96 = vld [vmem:[%s1 + $0xf0] sm:$0xf]
    %v97 = vld [vmem:[%s1 + $0xf4] sm:$0xf]
    %v98 = vld [vmem:[%s1 + $0xf8] sm:$0xf]
    %v99 = vld [vmem:[%s1 + $0xfc] sm:$0xf]
    %v100 = vld [vmem:[%s1 + $0x100] sm:$0xf]
    %v101 = vld [vmem:[%s1 + $0x104] sm:$0xf]
    %v102 = vld [vmem:[%s1 + $0x108] sm:$0xf]
    %v103 = vld [vmem:[%s1 + $0x10c] sm:$0xf]
    %v104 = vld [vmem:[%s1 + $0x110] sm:$0xf]
    %v105 = vld [vmem:[%s1 + $0x114] sm:$0xf]
    %v106 = vld [vmem:[%s1 + $0x118] sm:$0xf]
    %v107 = vld [vmem:[%s1 + $0x11c] sm:$0xf]
    %v108 = vld [vmem:[%s1 + $0x120] sm:$0xf]
    %v109 = vld [vmem:[%s1 + $0x124] sm:$0xf]
    %v110 = vld [vmem:[%s1 + $0x128] sm:$0xf]
    %v111 = vld [vmem:[%s1 + $0x12c] sm:$0xf]
    %v112 = vld [vmem:[%s1 + $0x130] sm:$0xf]
    %v113 = vld [vmem:[%s1 + $0x134] sm:$0xf]
    %v114 = vld [vmem:[%s1 + $0x138] sm:$0xf]
    %v115 = vld [vmem:[%s1 + $0x13c] sm:$0xf]
    %v116 = vld [vmem:[%s1 + $0x140] sm:$0xf]
    %v117 = vld [vmem:[%s1 + $0x144] sm:$0xf]
    %v118 = vld [vmem:[%s1 + $0x148] sm:$0xf]
    %v119 = vld [vmem:[%s1 + $0x14c] sm:$0xf]
    %v120 = vld [vmem:[%s1 + $0x150] sm:$0xf]
    %v121 = vld [vmem:[%s1 + $0x154] sm:$0xf]
    %v122 = vld [vmem:[%s1 + $0x158] sm:$0xf]
    %v123 = vld [vmem:[%s1 + $0x15c] sm:$0xf]
    %v124 = vld [vmem:[%s1 + $0x160] sm:$0xf]
    %v125 = vld [vmem:[%s1 + $0x164] sm:$0xf]
    %v126 = vld [vmem:[%s1 + $0x168] sm:$0xf]
    %v127 = vld [vmem:[%s1 + $0x16c] sm:$0xf]
    %v128 = vld [vmem:[%s1 + $0x170] sm:$0xf]
    %v129 = vld [vmem:[%s1 + $0x174] sm:$0xf]
    %v130 = vld [vmem:[%s1 + $0x178] sm:$0xf]
    %v131 = vld [vmem:[%s1 + $0x17c] sm:$0xf]
    %v132 = vld [vmem:[%s1 + $0x180] sm:$0xf]
    %v133 = vld [vmem:[%s1 + $0x184] sm:$0xf]
    %v134 = vld [vmem:[%s2] sm:$0x1]
    %v136 = vlaneseq
    %v137 = vshrl.u32 %v136, 7
    %v138 = vsub.s32 0, %v137
    %v139 = vrot.slane %v134, %v138
    %v145 = vunpack.c.l.b16 %v32
    %v146 = vunpack.c.h.b16 %v32
    %v147 = vunpack.c.l.b16 %v33
    %v148 = vunpack.c.h.b16 %v33
    %v149 = vunpack.c.l.b16 %v34
    %v150 = vunpack.c.h.b16 %v34
    %v151 = vunpack.c.l.b16 %v35
    %v152 = vpack.c.b16 %v145, %v145
    %v153 = vpack.c.b16 %v146, %v146
    %v154 = vpack.c.b16 %v147, %v147
    %v155 = vpack.c.b16 %v148, %v148
    %v156 = vpack.c.b16 %v149, %v149
    %v157 = vpack.c.b16 %v150, %v150
    %v158 = vpack.c.b16 %v151, %v151
    %v263 = vunpack.c.l.b16 %v36
    %v264 = vunpack.c.l.b16 %v37
    %v265 = vunpack.c.l.b16 %v38
    %v266 = vunpack.c.l.b16 %v39
    %v267 = vunpack.c.l.b16 %v40
    %v268 = vunpack.c.l.b16 %v41
    %v269 = vunpack.c.l.b16 %v42
    %v270 = vunpack.c.l.b16 %v43
    %v271 = vunpack.c.l.b16 %v44
    %v272 = vunpack.c.l.b16 %v45
    %v273 = vunpack.c.l.b16 %v46
    %v274 = vunpack.c.l.b16 %v47
    %v275 = vunpack.c.l.b16 %v48
    %v276 = vunpack.c.l.b16 %v49
    %v277 = vunpack.c.l.b16 %v50
    %v278 = vunpack.c.l.b16 %v51
    %v279 = vunpack.c.l.b16 %v52
    %v280 = vunpack.c.l.b16 %v53
    %v281 = vunpack.c.l.b16 %v54
    %v282 = vunpack.c.l.b16 %v55
    %v283 = vunpack.c.l.b16 %v56
    %v284 = vunpack.c.l.b16 %v57
    %v285 = vunpack.c.l.b16 %v58
    %v286 = vunpack.c.l.b16 %v59
    %v287 = vunpack.c.l.b16 %v60
    %v288 = vunpack.c.l.b16 %v61
    %v289 = vunpack.c.l.b16 %v62
    %v290 = vunpack.c.l.b16 %v63
    %v291 = vunpack.c.l.b16 %v64
    %v292 = vunpack.c.l.b16 %v65
    %v293 = vunpack.c.l.b16 %v66
    %v294 = vunpack.c.l.b16 %v67
    %v295 = vunpack.c.l.b16 %v68
    %v296 = vunpack.c.l.b16 %v69
    %v297 = vunpack.c.l.b16 %v70
    %v298 = vunpack.c.l.b16 %v71
    %v299 = vunpack.c.l.b16 %v72
    %v300 = vunpack.c.l.b16 %v73
    %v301 = vunpack.c.l.b16 %v74
    %v302 = vunpack.c.l.b16 %v75
    %v303 = vunpack.c.l.b16 %v76
    %v304 = vunpack.c.l.b16 %v77
    %v305 = vunpack.c.l.b16 %v78
    %v306 = vunpack.c.l.b16 %v79
    %v307 = vunpack.c.l.b16 %v80
    %v308 = vunpack.c.l.b16 %v81
    %v309 = vunpack.c.l.b16 %v82
    %v310 = vunpack.c.l.b16 %v83
    %v311 = vunpack.c.l.b16 %v84
    %v312 = vunpack.c.l.b16 %v85
    %v313 = vunpack.c.l.b16 %v86
    %v314 = vunpack.c.l.b16 %v87
    %v315 = vunpack.c.l.b16 %v88
    %v316 = vunpack.c.l.b16 %v89
    %v317 = vunpack.c.l.b16 %v90
    %v318 = vunpack.c.l.b16 %v91
    %v319 = vunpack.c.l.b16 %v92
    %v320 = vunpack.c.l.b16 %v93
    %v321 = vunpack.c.l.b16 %v94
    %v322 = vunpack.c.l.b16 %v95
    %v323 = vunpack.c.l.b16 %v96
    %v324 = vunpack.c.l.b16 %v97
    %v325 = vunpack.c.l.b16 %v98
    %v326 = vunpack.c.l.b16 %v99
    %v327 = vunpack.c.l.b16 %v100
    %v328 = vunpack.c.l.b16 %v101
    %v329 = vunpack.c.l.b16 %v102
    %v330 = vunpack.c.l.b16 %v103
    %v331 = vunpack.c.l.b16 %v104
    %v332 = vunpack.c.l.b16 %v105
    %v333 = vunpack.c.l.b16 %v106
    %v334 = vunpack.c.l.b16 %v107
    %v335 = vunpack.c.l.b16 %v108
    %v336 = vunpack.c.l.b16 %v109
    %v337 = vunpack.c.l.b16 %v110
    %v338 = vunpack.c.l.b16 %v111
    %v339 = vunpack.c.l.b16 %v112
    %v340 = vunpack.c.l.b16 %v113
    %v341 = vunpack.c.l.b16 %v114
    %v342 = vunpack.c.l.b16 %v115
    %v343 = vunpack.c.l.b16 %v116
    %v344 = vunpack.c.l.b16 %v117
    %v345 = vunpack.c.l.b16 %v118
    %v346 = vunpack.c.l.b16 %v119
    %v347 = vunpack.c.l.b16 %v120
    %v348 = vunpack.c.l.b16 %v121
    %v349 = vunpack.c.l.b16 %v122
    %v350 = vunpack.c.l.b16 %v123
    %v351 = vunpack.c.l.b16 %v124
    %v352 = vunpack.c.l.b16 %v125
    %v353 = vunpack.c.l.b16 %v126
    %v354 = vunpack.c.l.b16 %v127
    %v355 = vunpack.c.l.b16 %v128
    %v356 = vunpack.c.l.b16 %v129
    %v357 = vunpack.c.l.b16 %v130
    %v358 = vunpack.c.l.b16 %v131
    %v359 = vunpack.c.l.b16 %v132
    %v360 = vunpack.c.l.b16 %v133
    %v361 = vpack.c.b16 %v264, %v263
    %v362 = vpack.c.b16 %v266, %v265
    %v363 = vpack.c.b16 %v268, %v267
    %v364 = vpack.c.b16 %v270, %v269
    %v365 = vpack.c.b16 %v272, %v271
    %v366 = vpack.c.b16 %v274, %v273
    %v367 = vpack.c.b16 %v276, %v275
    %v368 = vpack.c.b16 %v278, %v277
    %v369 = vpack.c.b16 %v280, %v279
    %v370 = vpack.c.b16 %v282, %v281
    %v371 = vpack.c.b16 %v284, %v283
    %v372 = vpack.c.b16 %v286, %v285
    %v373 = vpack.c.b16 %v288, %v287
    %v374 = vpack.c.b16 %v290, %v289
    %v375 = vpack.c.b16 %v292, %v291
    %v376 = vpack.c.b16 %v294, %v293
    %v377 = vpack.c.b16 %v296, %v295
    %v378 = vpack.c.b16 %v298, %v297
    %v379 = vpack.c.b16 %v300, %v299
    %v380 = vpack.c.b16 %v302, %v301
    %v381 = vpack.c.b16 %v304, %v303
    %v382 = vpack.c.b16 %v306, %v305
    %v383 = vpack.c.b16 %v308, %v307
    %v384 = vpack.c.b16 %v310, %v309
    %v385 = vpack.c.b16 %v312, %v311
    %v386 = vpack.c.b16 %v314, %v313
    %v387 = vpack.c.b16 %v316, %v315
    %v388 = vpack.c.b16 %v318, %v317
    %v389 = vpack.c.b16 %v320, %v319
    %v390 = vpack.c.b16 %v322, %v321
    %v391 = vpack.c.b16 %v324, %v323
    %v392 = vpack.c.b16 %v326, %v325
    %v393 = vpack.c.b16 %v328, %v327
    %v394 = vpack.c.b16 %v330, %v329
    %v395 = vpack.c.b16 %v332, %v331
    %v396 = vpack.c.b16 %v334, %v333
    %v397 = vpack.c.b16 %v336, %v335
    %v398 = vpack.c.b16 %v338, %v337
    %v399 = vpack.c.b16 %v340, %v339
    %v400 = vpack.c.b16 %v342, %v341
    %v401 = vpack.c.b16 %v344, %v343
    %v402 = vpack.c.b16 %v346, %v345
    %v403 = vpack.c.b16 %v348, %v347
    %v404 = vpack.c.b16 %v350, %v349
    %v405 = vpack.c.b16 %v352, %v351
    %v406 = vpack.c.b16 %v354, %v353
    %v407 = vpack.c.b16 %v356, %v355
    %v408 = vpack.c.b16 %v358, %v357
    %v409 = vpack.c.b16 %v360, %v359
    %vm459 = vcmask 130048
    %v461 = vsel %vm459, %v158, 0
    %463 = vmatprep.subr.bf16.mxu0 0
    %464 = vmatpush1.bf16.msra.mxu0 %v361
    %465 = vmatprep.subr.bf16.mxu0 0
    %466 = vmatpush1.bf16.msra.mxu0 %v362
    %467 = vmatprep.subr.bf16.mxu0 0
    %468 = vmatpush1.bf16.msra.mxu0 %v363
    %469 = vmatprep.subr.bf16.mxu0 0
    %470 = vmatpush1.bf16.msra.mxu0 %v364
    %471 = vmatprep.subr.bf16.mxu0 0
    %472 = vmatpush1.bf16.msra.mxu0 %v365
    %473 = vmatprep.subr.bf16.mxu0 0
    %474 = vmatpush1.bf16.msra.mxu0 %v366
    %475 = vmatprep.subr.bf16.mxu0 0
    %476 = vmatpush1.bf16.msra.mxu0 %v367
    %477 = vmatprep.subr.bf16.mxu0 0
    %478 = vmatpush1.bf16.msra.mxu0 %v368
    %479 = vmatprep.subr.bf16.mxu0 0
    %480 = vmatpush1.bf16.msra.mxu0 %v369
    %481 = vmatprep.subr.bf16.mxu0 0
    %482 = vmatpush1.bf16.msra.mxu0 %v370
    %483 = vmatprep.subr.bf16.mxu0 0
    %484 = vmatpush1.bf16.msra.mxu0 %v371
    %485 = vmatprep.subr.bf16.mxu0 0
    %486 = vmatpush1.bf16.msra.mxu0 %v372
    %487 = vmatprep.subr.bf16.mxu0 0
    %488 = vmatpush1.bf16.msra.mxu0 %v373
    %489 = vmatprep.subr.bf16.mxu0 0
    %490 = vmatpush1.bf16.msra.mxu0 %v374
    %491 = vmatprep.subr.bf16.mxu0 0
    %492 = vmatpush1.bf16.msra.mxu0 %v375
    %493 = vmatprep.subr.bf16.mxu0 0
    %494 = vmatpush1.bf16.msra.mxu0 %v376
    %495 = vmatprep.mubr.bf16.mxu0 %v153
    %496 = vmatmul.mubr.bf16.gmra.mrb[0].mxu0 %v152
    %v497 = vpop.f32.mrb[0].mxu0
    %v498 = vadd.f32 %v139, %v497
    %v499 = vpop.f32.mrb[0].mxu0
    %v500 = vpop.f32.mrb[0].mxu0
    %v501 = vpop.f32.mrb[0].mxu0
    %502 = vdwg.mxu0
    %503 = vmatprep.subr.bf16.mxu0 0
    %504 = vmatpush1.bf16.msra.mxu0 %v377
    %505 = vmatprep.subr.bf16.mxu0 0
    %506 = vmatpush1.bf16.msra.mxu0 %v378
    %507 = vmatprep.subr.bf16.mxu0 0
    %508 = vmatpush1.bf16.msra.mxu0 %v379
    %509 = vmatprep.subr.bf16.mxu0 0
    %510 = vmatpush1.bf16.msra.mxu0 %v380
    %511 = vmatprep.subr.bf16.mxu0 0
    %512 = vmatpush1.bf16.msra.mxu0 %v381
    %513 = vmatprep.subr.bf16.mxu0 0
    %514 = vmatpush1.bf16.msra.mxu0 %v382
    %515 = vmatprep.subr.bf16.mxu0 0
    %516 = vmatpush1.bf16.msra.mxu0 %v383
    %517 = vmatprep.subr.bf16.mxu0 0
    %518 = vmatpush1.bf16.msra.mxu0 %v384
    %519 = vmatprep.subr.bf16.mxu0 0
    %520 = vmatpush1.bf16.msra.mxu0 %v385
    %521 = vmatprep.subr.bf16.mxu0 0
    %522 = vmatpush1.bf16.msra.mxu0 %v386
    %523 = vmatprep.subr.bf16.mxu0 0
    %524 = vmatpush1.bf16.msra.mxu0 %v387
    %525 = vmatprep.subr.bf16.mxu0 0
    %526 = vmatpush1.bf16.msra.mxu0 %v388
    %527 = vmatprep.subr.bf16.mxu0 0
    %528 = vmatpush1.bf16.msra.mxu0 %v389
    %529 = vmatprep.subr.bf16.mxu0 0
    %530 = vmatpush1.bf16.msra.mxu0 %v390
    %531 = vmatprep.subr.bf16.mxu0 0
    %532 = vmatpush1.bf16.msra.mxu0 %v391
    %533 = vmatprep.subr.bf16.mxu0 0
    %534 = vmatpush1.bf16.msra.mxu0 %v392
    %535 = vmatprep.mubr.bf16.mxu0 %v155
    %536 = vmatmul.mubr.bf16.gmra.mrb[0].mxu0 %v154
    %v537 = vpop.f32.mrb[0].mxu0
    %v538 = vadd.f32 %v498, %v537
    %v539 = vpop.f32.mrb[0].mxu0
    %v540 = vpop.f32.mrb[0].mxu0
    %v541 = vpop.f32.mrb[0].mxu0
    %542 = vdwg.mxu0
    %543 = vmatprep.subr.bf16.mxu0 0
    %544 = vmatpush1.bf16.msra.mxu0 %v393
    %545 = vmatprep.subr.bf16.mxu0 0
    %546 = vmatpush1.bf16.msra.mxu0 %v394
    %547 = vmatprep.subr.bf16.mxu0 0
    %548 = vmatpush1.bf16.msra.mxu0 %v395
    %549 = vmatprep.subr.bf16.mxu0 0
    %550 = vmatpush1.bf16.msra.mxu0 %v396
    %551 = vmatprep.subr.bf16.mxu0 0
    %552 = vmatpush1.bf16.msra.mxu0 %v397
    %553 = vmatprep.subr.bf16.mxu0 0
    %554 = vmatpush1.bf16.msra.mxu0 %v398
    %555 = vmatprep.subr.bf16.mxu0 0
    %556 = vmatpush1.bf16.msra.mxu0 %v399
    %557 = vmatprep.subr.bf16.mxu0 0
    %558 = vmatpush1.bf16.msra.mxu0 %v400
    %559 = vmatprep.subr.bf16.mxu0 0
    %560 = vmatpush1.bf16.msra.mxu0 %v401
    %561 = vmatprep.subr.bf16.mxu0 0
    %562 = vmatpush1.bf16.msra.mxu0 %v402
    %563 = vmatprep.subr.bf16.mxu0 0
    %564 = vmatpush1.bf16.msra.mxu0 %v403
    %565 = vmatprep.subr.bf16.mxu0 0
    %566 = vmatpush1.bf16.msra.mxu0 %v404
    %567 = vmatprep.subr.bf16.mxu0 0
    %568 = vmatpush1.bf16.msra.mxu0 %v405
    %569 = vmatprep.subr.bf16.mxu0 0
    %570 = vmatpush1.bf16.msra.mxu0 %v406
    %571 = vmatprep.subr.bf16.mxu0 0
    %572 = vmatpush1.bf16.msra.mxu0 %v407
    %573 = vmatprep.subr.bf16.mxu0 0
    %574 = vmatpush1.bf16.msra.mxu0 %v408
    %575 = vmatprep.mubr.bf16.mxu0 %v157
    %576 = vmatmul.mubr.bf16.gmra.mrb[0].mxu0 %v156
    %v577 = vpop.f32.mrb[0].mxu0
    %v578 = vadd.f32 %v538, %v577
    %v579 = vpop.f32.mrb[0].mxu0
    %v580 = vpop.f32.mrb[0].mxu0
    %v581 = vpop.f32.mrb[0].mxu0
    %582 = vdwg.mxu0
    %583 = vmatprep.subr.bf16.mxu0 0
    %584 = vmatpush1.bf16.msra.mxu0 %v409
    %585 = vmatprep.subr.bf16.mxu0 0
    %586 = vmatpush1.bf16.msra.mxu0 0
    %587 = vmatprep.subr.bf16.mxu0 0
    %588 = vmatpush1.bf16.msra.mxu0 0
    %589 = vmatprep.subr.bf16.mxu0 0
    %590 = vmatpush1.bf16.msra.mxu0 0
    %591 = vmatprep.subr.bf16.mxu0 0
    %592 = vmatpush1.bf16.msra.mxu0 0
    %593 = vmatprep.subr.bf16.mxu0 0
    %594 = vmatpush1.bf16.msra.mxu0 0
    %595 = vmatprep.subr.bf16.mxu0 0
    %596 = vmatpush1.bf16.msra.mxu0 0
    %597 = vmatprep.subr.bf16.mxu0 0
    %598 = vmatpush1.bf16.msra.mxu0 0
    %599 = vmatprep.subr.bf16.mxu0 0
    %600 = vmatpush1.bf16.msra.mxu0 0
    %601 = vmatprep.subr.bf16.mxu0 0
    %602 = vmatpush1.bf16.msra.mxu0 0
    %603 = vmatprep.subr.bf16.mxu0 0
    %604 = vmatpush1.bf16.msra.mxu0 0
    %605 = vmatprep.subr.bf16.mxu0 0
    %606 = vmatpush1.bf16.msra.mxu0 0
    %607 = vmatprep.subr.bf16.mxu0 0
    %608 = vmatpush1.bf16.msra.mxu0 0
    %609 = vmatprep.subr.bf16.mxu0 0
    %610 = vmatpush1.bf16.msra.mxu0 0
    %611 = vmatprep.subr.bf16.mxu0 0
    %612 = vmatpush1.bf16.msra.mxu0 0
    %613 = vmatprep.subr.bf16.mxu0 0
    %614 = vmatpush1.bf16.msra.mxu0 0
    %615 = vmatprep.mubr.bf16.mxu0 0
    %616 = vmatmul.mubr.bf16.gmra.mrb[0].mxu0 %v461
    %v617 = vpop.f32.mrb[0].mxu0
    %v618 = vadd.f32 %v578, %v617
    %v619 = vpop.f32.mrb[0].mxu0
    %v620 = vpop.f32.mrb[0].mxu0
    %v621 = vpop.f32.mrb[0].mxu0
    %622 = vdwg.mxu0
    %v623 = vmax.f32 %v618, 0.0
    %vm624 = vcmask 408576
    %625 = vst.msk [vmem:[#allocation2] sm:$0xff] %vm624, %v623
    %v626 = vpack.c.bf16 %v623, %v623
    %v627 = vld [vmem:[%s3] sm:$0xf]
    %v628 = vld [vmem:[%s3 + $0x4] sm:$0xf]
    %v629 = vld [vmem:[%s3 + $0x8] sm:$0xf]
    %v630 = vld [vmem:[%s3 + $0xc] sm:$0xf]
    %v631 = vld [vmem:[%s3 + $0x10] sm:$0xf]
    %v632 = vld [vmem:[%s3 + $0x14] sm:$0xf]
    %v633 = vld [vmem:[%s3 + $0x18] sm:$0x1]
    %v634 = vld [vmem:[%s4] sm:$0x1]
    %v636 = vlaneseq
    %v637 = vshrl.u32 %v636, 7
    %v638 = vsub.s32 0, %v637
    %v639 = vrot.slane %v634, %v638
    %v648 = vunpack.c.l.b16 %v627
    %v649 = vunpack.c.l.b16 %v628
    %v650 = vunpack.c.l.b16 %v629
    %v651 = vunpack.c.l.b16 %v630
    %v652 = vunpack.c.l.b16 %v631
    %v653 = vunpack.c.l.b16 %v632
    %v654 = vunpack.c.l.b16 %v633
    %v655 = vpack.c.b16 %v649, %v648
    %v656 = vpack.c.b16 %v651, %v650
    %v657 = vpack.c.b16 %v653, %v652
    %v658 = vpack.c.b16 %v654, %v654
    %v663 = vsel %vm624, %v626, 0
    %vm665 = vcmask 1040384
    %v667 = vsel %vm665, %v658, 0
    %669 = vmatprep.subr.bf16.mxu0 0
    %670 = vmatpush1.bf16.msra.mxu0 %v655
    %671 = vmatprep.subr.bf16.mxu0 0
    %672 = vmatpush1.bf16.msra.mxu0 %v656
    %673 = vmatprep.subr.bf16.mxu0 0
    %674 = vmatpush1.bf16.msra.mxu0 %v657
    %675 = vmatprep.subr.bf16.mxu0 0
    %676 = vmatpush1.bf16.msra.mxu0 %v667
    %677 = vmatprep.subr.bf16.mxu0 0
    %678 = vmatpush1.bf16.msra.mxu0 0
    %679 = vmatprep.subr.bf16.mxu0 0
    %680 = vmatpush1.bf16.msra.mxu0 0
    %681 = vmatprep.subr.bf16.mxu0 0
    %682 = vmatpush1.bf16.msra.mxu0 0
    %683 = vmatprep.subr.bf16.mxu0 0
    %684 = vmatpush1.bf16.msra.mxu0 0
    %685 = vmatprep.subr.bf16.mxu0 0
    %686 = vmatpush1.bf16.msra.mxu0 0
    %687 = vmatprep.subr.bf16.mxu0 0
    %688 = vmatpush1.bf16.msra.mxu0 0
    %689 = vmatprep.subr.bf16.mxu0 0
    %690 = vmatpush1.bf16.msra.mxu0 0
    %691 = vmatprep.subr.bf16.mxu0 0
    %692 = vmatpush1.bf16.msra.mxu0 0
    %693 = vmatprep.subr.bf16.mxu0 0
    %694 = vmatpush1.bf16.msra.mxu0 0
    %695 = vmatprep.subr.bf16.mxu0 0
    %696 = vmatpush1.bf16.msra.mxu0 0
    %697 = vmatprep.subr.bf16.mxu0 0
    %698 = vmatpush1.bf16.msra.mxu0 0
    %699 = vmatprep.subr.bf16.mxu0 0
    %700 = vmatpush1.bf16.msra.mxu0 0
    %701 = vmatprep.mubr.bf16.mxu0 0
    %702 = vmatmul.mubr.bf16.gmra.mrb[0].mxu0 %v663
    %v703 = vpop.f32.mrb[0].mxu0
    %v704 = vadd.f32 %v639, %v703
    %v705 = vpop.f32.mrb[0].mxu0
    %v706 = vpop.f32.mrb[0].mxu0
    %v707 = vpop.f32.mrb[0].mxu0
    %708 = vdwg.mxu0
    %v709 = vmax.f32 %v704, 0.0
    %710 = vst.msk [vmem:[#allocation4] sm:$0xff] %vm624, %v709
    %v711 = vpack.c.bf16 %v709, %v709
    %v712 = vld [vmem:[%s5] sm:$0xf]
    %v713 = vld [vmem:[%s5 + $0x4] sm:$0xf]
    %v714 = vld [vmem:[%s5 + $0x8] sm:$0xf]
    %v715 = vld [vmem:[%s5 + $0xc] sm:$0xf]
    %v716 = vld [vmem:[%s5 + $0x10] sm:$0xf]
    %v717 = vld [vmem:[%s5 + $0x14] sm:$0xf]
    %v718 = vld [vmem:[%s5 + $0x18] sm:$0x1]
    %v719 = vld [vmem:[%s6] sm:$0x1]
    %v721 = vlaneseq
    %v722 = vshrl.u32 %v721, 7
    %v723 = vsub.s32 0, %v722
    %v724 = vrot.slane %v719, %v723
    %v733 = vunpack.c.l.b16 %v712
    %v734 = vunpack.c.l.b16 %v713
    %v735 = vunpack.c.l.b16 %v714
    %v736 = vunpack.c.l.b16 %v715
    %v737 = vunpack.c.l.b16 %v716
    %v738 = vunpack.c.l.b16 %v717
    %v739 = vunpack.c.l.b16 %v718
    %v740 = vpack.c.b16 %v734, %v733
    %v741 = vpack.c.b16 %v736, %v735
    %v742 = vpack.c.b16 %v738, %v737
    %v743 = vpack.c.b16 %v739, %v739
    %v748 = vsel %vm624, %v711, 0
    %v751 = vsel %vm665, %v743, 0
    %753 = vmatprep.subr.bf16.mxu0 0
    %754 = vmatpush1.bf16.msra.mxu0 %v740
    %755 = vmatprep.subr.bf16.mxu0 0
    %756 = vmatpush1.bf16.msra.mxu0 %v741
    %757 = vmatprep.subr.bf16.mxu0 0
    %758 = vmatpush1.bf16.msra.mxu0 %v742
    %759 = vmatprep.subr.bf16.mxu0 0
    %760 = vmatpush1.bf16.msra.mxu0 %v751
    %761 = vmatprep.subr.bf16.mxu0 0
    %762 = vmatpush1.bf16.msra.mxu0 0
    %763 = vmatprep.subr.bf16.mxu0 0
    %764 = vmatpush1.bf16.msra.mxu0 0
    %765 = vmatprep.subr.bf16.mxu0 0
    %766 = vmatpush1.bf16.msra.mxu0 0
    %767 = vmatprep.subr.bf16.mxu0 0
    %768 = vmatpush1.bf16.msra.mxu0 0
    %769 = vmatprep.subr.bf16.mxu0 0
    %770 = vmatpush1.bf16.msra.mxu0 0
    %771 = vmatprep.subr.bf16.mxu0 0
    %772 = vmatpush1.bf16.msra.mxu0 0
    %773 = vmatprep.subr.bf16.mxu0 0
    %774 = vmatpush1.bf16.msra.mxu0 0
    %775 = vmatprep.subr.bf16.mxu0 0
    %776 = vmatpush1.bf16.msra.mxu0 0
    %777 = vmatprep.subr.bf16.mxu0 0
    %778 = vmatpush1.bf16.msra.mxu0 0
    %779 = vmatprep.subr.bf16.mxu0 0
    %780 = vmatpush1.bf16.msra.mxu0 0
    %781 = vmatprep.subr.bf16.mxu0 0
    %782 = vmatpush1.bf16.msra.mxu0 0
    %783 = vmatprep.subr.bf16.mxu0 0
    %784 = vmatpush1.bf16.msra.mxu0 0
    %785 = vmatprep.mubr.bf16.mxu0 0
    %786 = vmatmul.mubr.bf16.gmra.mrb[0].mxu0 %v748
    %v787 = vpop.f32.mrb[0].mxu0
    %v788 = vadd.f32 %v724, %v787
    %v789 = vpop.f32.mrb[0].mxu0
    %v790 = vpop.f32.mrb[0].mxu0
    %v791 = vpop.f32.mrb[0].mxu0
    %792 = vdwg.mxu0
    %vm793 = vcmask 80896
    %v794 = vsel %vm793, %v788, -inf
    %795 = vmax.xlane.f32.xlu0 %v794
    %v796 = vpop.xlane.xlu0 %795
    %v797 = vsub.f32 %v788, %v796
    %v798 = vmul.f32 %v797, 1.442695
    %v799 = vpow.pop %v798
    %v800 = vsel %vm793, %v799, 0.0
    %801 = vadd.xlane.f32.xlu0 %v800
    %v802 = vpop.xlane.xlu0 %801
    %v803 = vrcp.pop %v802
    %v804 = vmul.f32 %v799, %v803
    %805 = vst.msk [vmem:[#allocation6] sm:$0xff] %vm793, %v804
    // Predicated region
    $region30: #{neural_net_forward.1} parent=1 // pred_check
      _
    $region31: #{neural_net_forward.1} parent=1 // pred_check_branch
      %807 = sbr.rel (0) target = $region33
    $region32: #{neural_net_forward.1} parent=1 // pred_region
      %s809 = ssub.s32 128, 128
      %810 = vsyncadd [#allocation3], %s809
      %s812 = sshll.u32 [#allocation2], 4
      %s813 = int_to_ptr.vmem [resolvable:$true] %s812
      %815 = dma.vmem_to_hbm [thread:$0]  %s813, 128, %s7, [#allocation3]
    $region33: #{neural_net_forward.1} parent=1 // pred_fallthru
      _
    // Predicated region
    $region34: #{neural_net_forward.1} parent=1 // pred_check
      _
    $region35: #{neural_net_forward.1} parent=1 // pred_check_branch
      %817 = sbr.rel (0) target = $region37
    $region36: #{neural_net_forward.1} parent=1 // pred_region
      %s819 = ssub.s32 128, 128
      %820 = vsyncadd [#allocation5], %s819
      %s822 = sshll.u32 [#allocation4], 4
      %s823 = int_to_ptr.vmem [resolvable:$true] %s822
      %825 = dma.vmem_to_hbm [thread:$0]  %s823, 128, %s8, [#allocation5]
    $region37: #{neural_net_forward.1} parent=1 // pred_fallthru
      _
    // Predicated region
    $region38: #{neural_net_forward.1} parent=1 // pred_check
      _
    $region39: #{neural_net_forward.1} parent=1 // pred_check_branch
      %827 = sbr.rel (0) target = $region41
    $region40: #{neural_net_forward.1} parent=1 // pred_region
      %s829 = ssub.s32 128, 128
      %830 = vsyncadd [#allocation5], %s829
      %s832 = sshll.u32 [#allocation6], 4
      %s833 = int_to_ptr.vmem [resolvable:$true] %s832
      %835 = dma.vmem_to_hbm [thread:$0]  %s833, 128, %s9, [#allocation5]
    $region41: #{neural_net_forward.1} parent=1 // pred_fallthru
      _
    // Predicated region
    $region42: #{neural_net_forward.1} parent=1 // pred_check
      _
    $region43: #{neural_net_forward.1} parent=1 // pred_check_branch
      %837 = sbr.rel (0) target = $region45
    $region44: #{neural_net_forward.1} parent=1 // pred_region
      %838 = dma.done [#allocation3], 128
    $region45: #{neural_net_forward.1} parent=1 // pred_fallthru
      _
    // Predicated region
    $region46: #{neural_net_forward.1} parent=1 // pred_check
      _
    $region47: #{neural_net_forward.1} parent=1 // pred_check_branch
      %840 = sbr.rel (0) target = $region49
    $region48: #{neural_net_forward.1} parent=1 // pred_region
      %841 = dma.done [#allocation5], 128
    $region49: #{neural_net_forward.1} parent=1 // pred_fallthru
      _
    // Predicated region
    $region50: #{neural_net_forward.1} parent=1 // pred_check
      _
    $region51: #{neural_net_forward.1} parent=1 // pred_check_branch
      %843 = sbr.rel (0) target = $region53
    $region52: #{neural_net_forward.1} parent=1 // pred_region
      %844 = dma.done [#allocation5], 128
    $region53: #{neural_net_forward.1} parent=1 // pred_fallthru
      _
    %845 = vsyncpa [#allocation3], 1
    %846 = vsyncpa [#allocation5], 1

</llo_original>
